<compile_context>
chip_gen: v7x
topology: tpu7x:2x2x1
jax: 0.10.0
libtpu: 0.0.40
codegen_flags: <defaults>
</compile_context>

<pallas_src>
import functools

import jax
import jax.numpy as jnp
from jax import lax
from jax.experimental import pallas as pl
from jax.experimental.pallas import tpu as pltpu


# ----------------------------------------------------------------------------
# Wrapper-side packing: 3x3 conv (+ folded BN scale) -> 3 banded matrices
# ----------------------------------------------------------------------------
def _band_weights(w_hwio, scale, W, out_order=None):
    """Pack a 3x3 SAME conv + per-channel BN scale into 3 band matrices.

    Returns (3, W*Cin, W*Cout) bf16 such that, with x rows laid out as
    length-(W*Cin) lane vectors and a 1-row zero border top/bottom:

        out_row[h] = sum_kh  xpad_row[h + kh] @ M[kh]

    `out_order` permutes the output spatial columns (used to place even-w and
    odd-w outputs in the two lane halves so MaxPool's W step is one max).
    Scale is folded in f32 before the bf16 cast (keeps rounding well-behaved).
    """
    kh_, kw_, cin, cout = w_hwio.shape
    assert kh_ == 3 and kw_ == 3
    w_s = w_hwio.astype(jnp.float32) * scale.astype(jnp.float32)  # fold BN scale
    if out_order is None:
        out_order = jnp.arange(W)
    else:
        out_order = jnp.asarray(out_order, dtype=jnp.int32)
    win = jnp.arange(W)[:, None]               # input column index
    wout = out_order[None, :]                  # (possibly permuted) output column
    kw = win - wout + 1                        # tap index, valid in 0..2
    valid = (kw >= 0) & (kw <= 2)              # also encodes SAME padding along W
    taps = w_s[:, jnp.clip(kw, 0, 2), :, :]    # (3, W, W, Cin, Cout)
    taps = jnp.where(valid[None, :, :, None, None], taps, 0.0)
    m = taps.transpose(0, 1, 3, 2, 4).reshape(3, W * cin, W * cout)
    return m.astype(jnp.bfloat16)


# ----------------------------------------------------------------------------
# Fused kernel: conv1+BN1+ReLU -> conv2+BN2+ReLU -> MaxPool2d(2)
# ----------------------------------------------------------------------------
def _conv_band(slab_ref, m_ref, H, rows):
    """3 accumulated MXU matmuls over row-shifted views of the padded slab."""
    acc = None
    k = slab_ref.shape[-1]
    for kh in range(3):                                    # static, unrolled
        a = slab_ref[:, kh:kh + H, :].reshape(rows, k)     # bf16 MXU operand
        d = jnp.dot(a, m_ref[kh], preferred_element_type=jnp.float32)
        acc = d if acc is None else acc + d
    return acc                                             # (rows, W*Cout) f32


def _downscaling_kernel(x_ref, m1_ref, b1_ref, m2_ref, b2_ref, o_ref,
                        xpad_ref, zpad_ref, *, nb, H, W, cmid, cout):
    wci = x_ref.shape[-1]          # W * Cin
    wcm = W * cmid                 # W * Cmid
    rows = nb * H

    # --- Stage 0: H-padded input slab (bf16). Only the 2 border rows are
    # zeroed per step; the interior is fully overwritten (no full-slab zeroing).
    xpad_ref[:, 0:1, :] = jnp.zeros((nb, 1, wci), xpad_ref.dtype)
    xpad_ref[:, H + 1:H + 2, :] = jnp.zeros((nb, 1, wci), xpad_ref.dtype)
    # NOTE: sublane-offset-1 write / kh=1,2 reads below are the remaining small
    # unaligned accesses; negligible at these sizes.
    xpad_ref[:, 1:H + 1, :] = x_ref[...]

    # --- Conv1 (3x3 SAME, BN scale folded into weights) + bias + ReLU.
    z = jnp.maximum(_conv_band(xpad_ref, m1_ref, H, rows) + b1_ref[...], 0.0)

    # --- Hand-off stays in VMEM: H-padded bf16 slab for conv2.
    zpad_ref[:, 0:1, :] = jnp.zeros((nb, 1, wcm), zpad_ref.dtype)
    zpad_ref[:, H + 1:H + 2, :] = jnp.zeros((nb, 1, wcm), zpad_ref.dtype)
    zpad_ref[:, 1:H + 1, :] = z.reshape(nb, H, wcm).astype(zpad_ref.dtype)

    # --- Conv2 + bias + ReLU. Output columns are pre-permuted [even-w | odd-w].
    y = jnp.maximum(_conv_band(zpad_ref, m2_ref, H, rows) + b2_ref[...], 0.0)

    # --- MaxPool2d(2):
    # W direction: thanks to the column permutation, the two lane halves are
    # exactly the even/odd-w partners -> one lane-dense maximum, result already
    # in (ow*Cout) lane order.
    half = (W // 2) * cout
    yw = jnp.maximum(y[:, :half], y[:, half:])             # (nb*H, ow*Cout)
    # H direction: sublane-pair max.
    yh = jnp.max(yw.reshape(nb, H // 2, 2, half), axis=2)  # (nb, oh, ow*Cout)

    o_ref[...] = yh.astype(o_ref.dtype)


# ----------------------------------------------------------------------------
# Wrappers
# ----------------------------------------------------------------------------
def downscaling_block_nhwc(x_nhwc, params):
    """x_nhwc: (N,H,W,Cin) f32. Returns (N,H//2,W//2,Cout) f32."""
    N, H, W, cin = x_nhwc.shape
    cmid = params["w1"].shape[-1]
    cout = params["w2"].shape[-1]
    assert H % 2 == 0 and W % 2 == 0, "MaxPool2d(2) path assumes even H, W"
    assert H % 8 == 0, "free row reshapes assume H is a multiple of 8"
    oh, ow = H // 2, W // 2

    # Images per grid step: amortize the ~0.35us/step overhead, but keep >= 2
    # grid steps so both v7x TensorCores get work under ("parallel",).
    nb = 1
    for cand in (8, 4, 2):
        if N % cand == 0 and N // cand >= 2:
            nb = cand
            break

    # Banded, BN-scale-folded weights (bf16); conv2 columns permuted so the
    # 2x-W pooling pairs sit in opposite lane halves.
    order = [2 * i for i in range(ow)] + [2 * i + 1 for i in range(ow)]
    m1 = _band_weights(params["w1"], params["s1"], W)
    m2 = _band_weights(params["w2"], params["s2"], W, out_order=order)
    b1 = jnp.tile(params["b1"].astype(jnp.float32), W).reshape(1, W * cmid)
    b2 = jnp.tile(params["b2"].astype(jnp.float32), W).reshape(1, W * cout)

    # Lane-dense input at the pallas_call boundary: (N, H, W*Cin), bf16.
    xb = x_nhwc.astype(jnp.bfloat16).reshape(N, H, W * cin)

    kernel = functools.partial(_downscaling_kernel,
                               nb=nb, H=H, W=W, cmid=cmid, cout=cout)

    out = pl.pallas_call(
        kernel,
        out_shape=jax.ShapeDtypeStruct((N, oh, ow * cout), jnp.float32),
        grid=(N // nb,),
        in_specs=[
            pl.BlockSpec((nb, H, W * cin), lambda n: (n, 0, 0)),
            pl.BlockSpec((3, W * cin, W * cmid), lambda n: (0, 0, 0)),
            pl.BlockSpec((1, W * cmid), lambda n: (0, 0)),
            pl.BlockSpec((3, W * cmid, W * cout), lambda n: (0, 0, 0)),
            pl.BlockSpec((1, W * cout), lambda n: (0, 0)),
        ],
        out_specs=pl.BlockSpec((nb, oh, ow * cout), lambda n: (n, 0, 0)),
        scratch_shapes=[
            pltpu.VMEM((nb, H + 2, W * cin), jnp.bfloat16),   # H-padded input slab
            pltpu.VMEM((nb, H + 2, W * cmid), jnp.bfloat16),  # H-padded intermediate
        ],
        compiler_params=pltpu.CompilerParams(
            dimension_semantics=("parallel",),
            vmem_limit_bytes=32 * 1024 * 1024,
        ),
    )(xb, m1, b1, m2, b2)

    return out.reshape(N, oh, ow, cout)


def downscaling_block(x_nchw, params):
    # NCHW <-> NHWC only at the block boundary (PyTorch parity). If chained
    # inside a UNet, call downscaling_block_nhwc directly and stay NHWC.
    x = jnp.transpose(x_nchw, (0, 2, 3, 1))
    y = downscaling_block_nhwc(x, params)
    return jnp.transpose(y, (0, 3, 1, 2))


# ----------------------------------------------------------------------------
# Pure-JAX reference (mirrors the kernel's bf16 operand rounding and the f32
# BN-scale fold, so the comparison isolates the kernel math; eval-mode BN)
# ----------------------------------------------------------------------------
def _bf16_round(a):
    return a.astype(jnp.bfloat16).astype(jnp.float32)


def _ref_conv(x_nhwc, w_hwio):
    return lax.conv_general_dilated(
        x_nhwc, w_hwio, window_strides=(1, 1), padding="SAME",
        dimension_numbers=("NHWC", "HWIO", "NHWC"),
        precision=lax.Precision.HIGHEST,
    )


def reference_block(x_nchw, params):
    x = _bf16_round(jnp.transpose(x_nchw, (0, 2, 3, 1)))
    w1 = _bf16_round(params["w1"] * params["s1"])   # scale folded in f32, then bf16
    w2 = _bf16_round(params["w2"] * params["s2"])
    z = jnp.maximum(_ref_conv(x, w1) + params["b1"], 0.0)
    z = _bf16_round(z)                               # kernel feeds conv2 in bf16
    y = jnp.maximum(_ref_conv(z, w2) + params["b2"], 0.0)
    y = lax.reduce_window(y, -jnp.inf, lax.max, (1, 2, 2, 1), (1, 2, 2, 1), "VALID")
    return jnp.transpose(y, (0, 3, 1, 2))


def fold_bn(gamma, beta, mean, var, eps=1e-5):
    scale = gamma / jnp.sqrt(var + eps)
    bias = beta - mean * scale
    return scale, bias


if __name__ == "__main__":
    N, Cin, H, W = 2, 4, 16, 16
    Cout = 8                 # mid_channels == out_channels in the module
    key = jax.random.PRNGKey(0)
    k_x, k_w1, k_w2, k_m1, k_m2 = jax.random.split(key, 5)

    x = jax.random.normal(k_x, (N, Cin, H, W), jnp.float32)

    # Conv weights (HWIO), deterministic
    w1 = 0.1 * jax.random.normal(k_w1, (3, 3, Cin, Cout), jnp.float32)
    w2 = 0.1 * jax.random.normal(k_w2, (3, 3, Cout, Cout), jnp.float32)

    # Deterministic (non-trivial) BN parameters, eval-mode fold
    g1 = jnp.linspace(0.5, 1.5, Cout, dtype=jnp.float32)
    be1 = jnp.linspace(-0.1, 0.1, Cout, dtype=jnp.float32)
    mu1 = 0.05 * jax.random.normal(k_m1, (Cout,), jnp.float32)
    v1 = jnp.linspace(0.8, 1.2, Cout, dtype=jnp.float32)
    g2 = jnp.linspace(1.2, 0.6, Cout, dtype=jnp.float32)
    be2 = jnp.linspace(0.05, -0.05, Cout, dtype=jnp.float32)
    mu2 = 0.05 * jax.random.normal(k_m2, (Cout,), jnp.float32)
    v2 = jnp.linspace(0.9, 1.1, Cout, dtype=jnp.float32)

    s1, b1 = fold_bn(g1, be1, mu1, v1)
    s2, b2 = fold_bn(g2, be2, mu2, v2)

    params = {"w1": w1, "s1": s1, "b1": b1, "w2": w2, "s2": s2, "b2": b2}

    out = jax.block_until_ready(jax.jit(downscaling_block)(x, params))
    ref = jax.block_until_ready(jax.jit(reference_block)(x, params))

    assert out.shape == (N, Cout, H // 2, W // 2), out.shape
    max_err = float(jnp.max(jnp.abs(out - ref)))
    assert jnp.allclose(out, ref, atol=1e-2, rtol=1e-2), max_err
    print("KERNEL_OK")
</pallas_src>

<mosaic_0001>
module attributes {stable_mosaic.version = 11 : i64} {
  func.func @_downscaling_kernel(%arg0: i32, %arg1: memref<1x16x64xbf16, #tpu.memory_space<vmem>>, %arg2: memref<3x64x128xbf16, #tpu.memory_space<vmem>>, %arg3: memref<1x128xf32, #tpu.memory_space<vmem>>, %arg4: memref<3x128x128xbf16, #tpu.memory_space<vmem>>, %arg5: memref<1x128xf32, #tpu.memory_space<vmem>>, %arg6: memref<1x8x64xf32, #tpu.memory_space<vmem>>, %arg7: memref<1x18x64xbf16, #tpu.memory_space<vmem>>, %arg8: memref<1x18x128xbf16, #tpu.memory_space<vmem>>) attributes {dimension_semantics = [#tpu.dimension_semantics<parallel>], iteration_bounds = array<i64: 2>, scalar_prefetch = 0 : i64, scratch_operands = 2 : i64, tpu.core_type = #tpu.core_type<tc>, window_params = [{transform_indices = @transform_0, window_bounds = array<i64: 1, 16, 64>}, {pipeline_mode = #tpu.pipeline_mode<synchronous>, transform_indices = @transform_1, window_bounds = array<i64: 3, 64, 128>}, {pipeline_mode = #tpu.pipeline_mode<synchronous>, transform_indices = @transform_2, window_bounds = array<i64: 1, 128>}, {pipeline_mode = #tpu.pipeline_mode<synchronous>, transform_indices = @transform_3, window_bounds = array<i64: 3, 128, 128>}, {pipeline_mode = #tpu.pipeline_mode<synchronous>, transform_indices = @transform_4, window_bounds = array<i64: 1, 128>}, {transform_indices = @transform_5, window_bounds = array<i64: 1, 8, 64>}]} {
    %cst = arith.constant 0.000000e+00 : bf16
    %0 = vector.broadcast %cst : bf16 to vector<1x1x64xbf16>
    %c0 = arith.constant 0 : index
    %c0_0 = arith.constant 0 : index
    %c0_1 = arith.constant 0 : index
    %1 = vector.load %arg7[%c0, %c0_0, %c0_1] : memref<1x18x64xbf16, #tpu.memory_space<vmem>>, vector<1x1x64xbf16>
    tpu.vector_store %arg7[%c0, %c0_0, %c0_1], %0 {strides = array<i32>} : memref<1x18x64xbf16, #tpu.memory_space<vmem>>, vector<1x1x64xbf16>,
    %cst_2 = arith.constant 0.000000e+00 : bf16
    %2 = vector.broadcast %cst_2 : bf16 to vector<1x1x64xbf16>
    %c0_3 = arith.constant 0 : index
    %c17 = arith.constant 17 : index
    %c0_4 = arith.constant 0 : index
    %3 = vector.load %arg7[%c0_3, %c17, %c0_4] : memref<1x18x64xbf16, #tpu.memory_space<vmem>>, vector<1x1x64xbf16>
    tpu.vector_store %arg7[%c0_3, %c17, %c0_4], %2 {strides = array<i32>} : memref<1x18x64xbf16, #tpu.memory_space<vmem>>, vector<1x1x64xbf16>,
    %c0_5 = arith.constant 0 : index
    %c0_6 = arith.constant 0 : index
    %c0_7 = arith.constant 0 : index
    %4 = vector.load %arg1[%c0_5, %c0_6, %c0_7] : memref<1x16x64xbf16, #tpu.memory_space<vmem>>, vector<1x16x64xbf16>
    %c0_8 = arith.constant 0 : index
    %c1 = arith.constant 1 : index
    %c0_9 = arith.constant 0 : index
    %5 = vector.load %arg7[%c0_8, %c1, %c0_9] : memref<1x18x64xbf16, #tpu.memory_space<vmem>>, vector<1x16x64xbf16>
    tpu.vector_store %arg7[%c0_8, %c1, %c0_9], %4 {strides = array<i32>} : memref<1x18x64xbf16, #tpu.memory_space<vmem>>, vector<1x16x64xbf16>,
    %c0_10 = arith.constant 0 : index
    %c0_11 = arith.constant 0 : index
    %c0_12 = arith.constant 0 : index
    %6 = vector.load %arg7[%c0_10, %c0_11, %c0_12] : memref<1x18x64xbf16, #tpu.memory_space<vmem>>, vector<1x16x64xbf16>
    %7 = vector.shape_cast %6 : vector<1x16x64xbf16> to vector<16x64xbf16>
    %c0_13 = arith.constant 0 : index
    %c0_14 = arith.constant 0 : index
    %c0_15 = arith.constant 0 : index
    %8 = vector.load %arg2[%c0_13, %c0_14, %c0_15] : memref<3x64x128xbf16, #tpu.memory_space<vmem>>, vector<1x64x128xbf16>
    %9 = vector.shape_cast %8 : vector<1x64x128xbf16> to vector<64x128xbf16>
    %cst_16 = arith.constant dense<0.000000e+00> : vector<16x128xf32>
    %10 = tpu.matmul %7, %9, %cst_16 {dimension_numbers = #tpu.dot_dimension_numbers<[1], [0], [0], [1], [0, 0, 1, 1], [], []>} : vector<16x64xbf16>, vector<64x128xbf16>, vector<16x128xf32> -> vector<16x128xf32>
    %c0_17 = arith.constant 0 : index
    %c1_18 = arith.constant 1 : index
    %c0_19 = arith.constant 0 : index
    %11 = vector.load %arg7[%c0_17, %c1_18, %c0_19] : memref<1x18x64xbf16, #tpu.memory_space<vmem>>, vector<1x16x64xbf16>
    %12 = vector.shape_cast %11 : vector<1x16x64xbf16> to vector<16x64xbf16>
    %c1_20 = arith.constant 1 : index
    %c0_21 = arith.constant 0 : index
    %c0_22 = arith.constant 0 : index
    %13 = vector.load %arg2[%c1_20, %c0_21, %c0_22] : memref<3x64x128xbf16, #tpu.memory_space<vmem>>, vector<1x64x128xbf16>
    %14 = vector.shape_cast %13 : vector<1x64x128xbf16> to vector<64x128xbf16>
    %cst_23 = arith.constant dense<0.000000e+00> : vector<16x128xf32>
    %15 = tpu.matmul %12, %14, %cst_23 {dimension_numbers = #tpu.dot_dimension_numbers<[1], [0], [0], [1], [0, 0, 1, 1], [], []>} : vector<16x64xbf16>, vector<64x128xbf16>, vector<16x128xf32> -> vector<16x128xf32>
    %16 = arith.addf %10, %15 : vector<16x128xf32>
    %c0_24 = arith.constant 0 : index
    %c2 = arith.constant 2 : index
    %c0_25 = arith.constant 0 : index
    %17 = vector.load %arg7[%c0_24, %c2, %c0_25] : memref<1x18x64xbf16, #tpu.memory_space<vmem>>, vector<1x16x64xbf16>
    %18 = vector.shape_cast %17 : vector<1x16x64xbf16> to vector<16x64xbf16>
    %c2_26 = arith.constant 2 : index
    %c0_27 = arith.constant 0 : index
    %c0_28 = arith.constant 0 : index
    %19 = vector.load %arg2[%c2_26, %c0_27, %c0_28] : memref<3x64x128xbf16, #tpu.memory_space<vmem>>, vector<1x64x128xbf16>
    %20 = vector.shape_cast %19 : vector<1x64x128xbf16> to vector<64x128xbf16>
    %cst_29 = arith.constant dense<0.000000e+00> : vector<16x128xf32>
    %21 = tpu.matmul %18, %20, %cst_29 {dimension_numbers = #tpu.dot_dimension_numbers<[1], [0], [0], [1], [0, 0, 1, 1], [], []>} : vector<16x64xbf16>, vector<64x128xbf16>, vector<16x128xf32> -> vector<16x128xf32>
    %22 = arith.addf %16, %21 : vector<16x128xf32>
    %c0_30 = arith.constant 0 : index
    %c0_31 = arith.constant 0 : index
    %23 = vector.load %arg3[%c0_30, %c0_31] : memref<1x128xf32, #tpu.memory_space<vmem>>, vector<1x128xf32>
    %24 = vector.broadcast %23 : vector<1x128xf32> to vector<16x128xf32>
    %25 = arith.addf %22, %24 : vector<16x128xf32>
    %cst_32 = arith.constant 0.000000e+00 : f32
    %26 = vector.broadcast %cst_32 : f32 to vector<16x128xf32>
    %27 = arith.maximumf %25, %26 : vector<16x128xf32>
    %cst_33 = arith.constant 0.000000e+00 : bf16
    %28 = vector.broadcast %cst_33 : bf16 to vector<1x1x128xbf16>
    %c0_34 = arith.constant 0 : index
    %c0_35 = arith.constant 0 : index
    %c0_36 = arith.constant 0 : index
    %29 = vector.load %arg8[%c0_34, %c0_35, %c0_36] : memref<1x18x128xbf16, #tpu.memory_space<vmem>>, vector<1x1x128xbf16>
    tpu.vector_store %arg8[%c0_34, %c0_35, %c0_36], %28 {strides = array<i32>} : memref<1x18x128xbf16, #tpu.memory_space<vmem>>, vector<1x1x128xbf16>,
    %cst_37 = arith.constant 0.000000e+00 : bf16
    %30 = vector.broadcast %cst_37 : bf16 to vector<1x1x128xbf16>
    %c0_38 = arith.constant 0 : index
    %c17_39 = arith.constant 17 : index
    %c0_40 = arith.constant 0 : index
    %31 = vector.load %arg8[%c0_38, %c17_39, %c0_40] : memref<1x18x128xbf16, #tpu.memory_space<vmem>>, vector<1x1x128xbf16>
    tpu.vector_store %arg8[%c0_38, %c17_39, %c0_40], %30 {strides = array<i32>} : memref<1x18x128xbf16, #tpu.memory_space<vmem>>, vector<1x1x128xbf16>,
    %32 = vector.shape_cast %27 : vector<16x128xf32> to vector<1x16x128xf32>
    %33 = arith.truncf %32 : vector<1x16x128xf32> to vector<1x16x128xbf16>
    %c0_41 = arith.constant 0 : index
    %c1_42 = arith.constant 1 : index
    %c0_43 = arith.constant 0 : index
    %34 = vector.load %arg8[%c0_41, %c1_42, %c0_43] : memref<1x18x128xbf16, #tpu.memory_space<vmem>>, vector<1x16x128xbf16>
    tpu.vector_store %arg8[%c0_41, %c1_42, %c0_43], %33 {strides = array<i32>} : memref<1x18x128xbf16, #tpu.memory_space<vmem>>, vector<1x16x128xbf16>,
    %c0_44 = arith.constant 0 : index
    %c0_45 = arith.constant 0 : index
    %c0_46 = arith.constant 0 : index
    %35 = vector.load %arg8[%c0_44, %c0_45, %c0_46] : memref<1x18x128xbf16, #tpu.memory_space<vmem>>, vector<1x16x128xbf16>
    %36 = vector.shape_cast %35 : vector<1x16x128xbf16> to vector<16x128xbf16>
    %c0_47 = arith.constant 0 : index
    %c0_48 = arith.constant 0 : index
    %c0_49 = arith.constant 0 : index
    %37 = vector.load %arg4[%c0_47, %c0_48, %c0_49] : memref<3x128x128xbf16, #tpu.memory_space<vmem>>, vector<1x128x128xbf16>
    %38 = vector.shape_cast %37 : vector<1x128x128xbf16> to vector<128x128xbf16>
    %cst_50 = arith.constant dense<0.000000e+00> : vector<16x128xf32>
    %39 = tpu.matmul %36, %38, %cst_50 {dimension_numbers = #tpu.dot_dimension_numbers<[1], [0], [0], [1], [0, 0, 1, 1], [], []>} : vector<16x128xbf16>, vector<128x128xbf16>, vector<16x128xf32> -> vector<16x128xf32>
    %c0_51 = arith.constant 0 : index
    %c1_52 = arith.constant 1 : index
    %c0_53 = arith.constant 0 : index
    %40 = vector.load %arg8[%c0_51, %c1_52, %c0_53] : memref<1x18x128xbf16, #tpu.memory_space<vmem>>, vector<1x16x128xbf16>
    %41 = vector.shape_cast %40 : vector<1x16x128xbf16> to vector<16x128xbf16>
    %c1_54 = arith.constant 1 : index
    %c0_55 = arith.constant 0 : index
    %c0_56 = arith.constant 0 : index
    %42 = vector.load %arg4[%c1_54, %c0_55, %c0_56] : memref<3x128x128xbf16, #tpu.memory_space<vmem>>, vector<1x128x128xbf16>
    %43 = vector.shape_cast %42 : vector<1x128x128xbf16> to vector<128x128xbf16>
    %cst_57 = arith.constant dense<0.000000e+00> : vector<16x128xf32>
    %44 = tpu.matmul %41, %43, %cst_57 {dimension_numbers = #tpu.dot_dimension_numbers<[1], [0], [0], [1], [0, 0, 1, 1], [], []>} : vector<16x128xbf16>, vector<128x128xbf16>, vector<16x128xf32> -> vector<16x128xf32>
    %45 = arith.addf %39, %44 : vector<16x128xf32>
    %c0_58 = arith.constant 0 : index
    %c2_59 = arith.constant 2 : index
    %c0_60 = arith.constant 0 : index
    %46 = vector.load %arg8[%c0_58, %c2_59, %c0_60] : memref<1x18x128xbf16, #tpu.memory_space<vmem>>, vector<1x16x128xbf16>
    %47 = vector.shape_cast %46 : vector<1x16x128xbf16> to vector<16x128xbf16>
    %c2_61 = arith.constant 2 : index
    %c0_62 = arith.constant 0 : index
    %c0_63 = arith.constant 0 : index
    %48 = vector.load %arg4[%c2_61, %c0_62, %c0_63] : memref<3x128x128xbf16, #tpu.memory_space<vmem>>, vector<1x128x128xbf16>
    %49 = vector.shape_cast %48 : vector<1x128x128xbf16> to vector<128x128xbf16>
    %cst_64 = arith.constant dense<0.000000e+00> : vector<16x128xf32>
    %50 = tpu.matmul %47, %49, %cst_64 {dimension_numbers = #tpu.dot_dimension_numbers<[1], [0], [0], [1], [0, 0, 1, 1], [], []>} : vector<16x128xbf16>, vector<128x128xbf16>, vector<16x128xf32> -> vector<16x128xf32>
    %51 = arith.addf %45, %50 : vector<16x128xf32>
    %c0_65 = arith.constant 0 : index
    %c0_66 = arith.constant 0 : index
    %52 = vector.load %arg5[%c0_65, %c0_66] : memref<1x128xf32, #tpu.memory_space<vmem>>, vector<1x128xf32>
    %53 = vector.broadcast %52 : vector<1x128xf32> to vector<16x128xf32>
    %54 = arith.addf %51, %53 : vector<16x128xf32>
    %cst_67 = arith.constant 0.000000e+00 : f32
    %55 = vector.broadcast %cst_67 : f32 to vector<16x128xf32>
    %56 = arith.maximumf %54, %55 : vector<16x128xf32>
    %57 = vector.extract_strided_slice %56 {offsets = [0, 0], sizes = [16, 64], strides = [1, 1]} : vector<16x128xf32> to vector<16x64xf32>
    %58 = vector.extract_strided_slice %56 {offsets = [0, 64], sizes = [16, 64], strides = [1, 1]} : vector<16x128xf32> to vector<16x64xf32>
    %59 = arith.maximumf %57, %58 : vector<16x64xf32>
    %60 = vector.shape_cast %59 : vector<16x64xf32> to vector<1x8x2x64xf32>
    %cst_68 = arith.constant dense<0xFF800000> : vector<1x8x64xf32>
    %61 = vector.multi_reduction <maximumf>, %60, %cst_68 [2] : vector<1x8x2x64xf32> to vector<1x8x64xf32>
    %c0_69 = arith.constant 0 : index
    %c0_70 = arith.constant 0 : index
    %c0_71 = arith.constant 0 : index
    %62 = vector.load %arg6[%c0_69, %c0_70, %c0_71] : memref<1x8x64xf32, #tpu.memory_space<vmem>>, vector<1x8x64xf32>
    tpu.vector_store %arg6[%c0_69, %c0_70, %c0_71], %61 {strides = array<i32>} : memref<1x8x64xf32, #tpu.memory_space<vmem>>, vector<1x8x64xf32>,
    return
  }
  func.func @transform_0(%arg0: i32) -> (i32, i32, i32) {
    %c0_i32 = arith.constant 0 : i32
    %c0_i32_0 = arith.constant 0 : i32
    %c0_i32_1 = arith.constant 0 : i32
    return %arg0, %c0_i32, %c0_i32_0 : i32, i32, i32
  }
  func.func @transform_1(%arg0: i32) -> (i32, i32, i32) {
    %c0_i32 = arith.constant 0 : i32
    %c0_i32_0 = arith.constant 0 : i32
    %c0_i32_1 = arith.constant 0 : i32
    %c0_i32_2 = arith.constant 0 : i32
    return %c0_i32, %c0_i32_0, %c0_i32_1 : i32, i32, i32
  }
  func.func @transform_2(%arg0: i32) -> (i32, i32) {
    %c0_i32 = arith.constant 0 : i32
    %c0_i32_0 = arith.constant 0 : i32
    %c0_i32_1 = arith.constant 0 : i32
    return %c0_i32, %c0_i32_0 : i32, i32
  }
  func.func @transform_3(%arg0: i32) -> (i32, i32, i32) {
    %c0_i32 = arith.constant 0 : i32
    %c0_i32_0 = arith.constant 0 : i32
    %c0_i32_1 = arith.constant 0 : i32
    %c0_i32_2 = arith.constant 0 : i32
    return %c0_i32, %c0_i32_0, %c0_i32_1 : i32, i32, i32
  }
  func.func @transform_4(%arg0: i32) -> (i32, i32) {
    %c0_i32 = arith.constant 0 : i32
    %c0_i32_0 = arith.constant 0 : i32
    %c0_i32_1 = arith.constant 0 : i32
    return %c0_i32, %c0_i32_0 : i32, i32
  }
  func.func @transform_5(%arg0: i32) -> (i32, i32, i32) {
    %c0_i32 = arith.constant 0 : i32
    %c0_i32_0 = arith.constant 0 : i32
    %c0_i32_1 = arith.constant 0 : i32
    return %arg0, %c0_i32, %c0_i32_0 : i32, i32, i32
  }
}

</mosaic_0001>

<llo_original>
// kernel: tile.13
$region0: #{tile.13}
  #allocation0 [shape = 's32[1]{0}', space=sflag, size = 0x4, scoped, tag = 'scoped memory for tile.13']
  %s0 = inlined_call_operand.vmem [shape: f32[8], index: 0, kind: input, shape index: {}]
  %s1 = inlined_call_operand.vmem [shape: f32[16,8], index: 1, kind: output, shape index: {}]
  // Predicated region
  $region2: #{tile.13} parent=0 // pred_check
    _
  $region3: #{tile.13} parent=0 // pred_check_branch
    %3 = sbr.rel (0) target = $region5
  $region4: #{tile.13} parent=0 // pred_region
    _
  $region5: #{tile.13} parent=0 // pred_fallthru
    _
  %v4 = vld [vmem:[%s0] ss:$0 sm:$0xff]
  %5 = vst [vmem:[%s1] sm:$0xff] %v4
  %s6 = scalar_lea.vmem %s1, 8
  %7 = vst [vmem:[%s6] sm:$0xff] %v4

// kernel: tile.14
$region0: #{tile.14}
  %s0 = inlined_call_operand.vmem [shape: f32[16,8], index: 0, kind: input, shape index: {}]
  %s1 = inlined_call_operand.vmem [shape: f32[1,128], index: 1, kind: output, shape index: {}]
  $region1: #{tile.14} parent=0
    #allocation0 [shape = 'u8[4096]{0}', space=vmem, size = 0x1000, scoped, tag = 'scoped mem for output reshape']
    %v2 = vld [vmem:[%s0] sm:$0x1]
    %vm3 = vcmask 64512
    %4 = vst.msk [vmem:[#allocation0] sm:$0x1] %vm3, %v2
    %s5 = scalar_lea.vmem %s0, 15
    %v6 = vld [vmem:[%s5] sm:$0x1]
    %7 = vrot.lane.b32.xlu0 %v6, 120
    %v8 = vpop.permute.xlu0 %7
    %vm9 = vcmask 1048512
    %10 = vst.msk [vmem:[#allocation0] sm:$0x1] %vm9, %v8
    %s11 = scalar_lea.vmem %s0, 14
    %v12 = vld [vmem:[%s11] sm:$0x1]
    %13 = vrot.lane.b32.xlu0 %v12, 112
    %v14 = vpop.permute.xlu0 %13
    %vm15 = vcmask 982912
    %16 = vst.msk [vmem:[#allocation0] sm:$0x1] %vm15, %v14
    %s17 = scalar_lea.vmem %s0, 13
    %v18 = vld [vmem:[%s17] sm:$0x1]
    %19 = vrot.lane.b32.xlu0 %v18, 104
    %v20 = vpop.permute.xlu0 %19
    %vm21 = vcmask 917312
    %22 = vst.msk [vmem:[#allocation0] sm:$0x1] %vm21, %v20
    %s23 = scalar_lea.vmem %s0, 12
    %v24 = vld [vmem:[%s23] sm:$0x1]
    %25 = vrot.lane.b32.xlu0 %v24, 96
    %v26 = vpop.permute.xlu0 %25
    %vm27 = vcmask 851712
    %28 = vst.msk [vmem:[#allocation0] sm:$0x1] %vm27, %v26
    %s29 = scalar_lea.vmem %s0, 11
    %v30 = vld [vmem:[%s29] sm:$0x1]
    %31 = vrot.lane.b32.xlu0 %v30, 88
    %v32 = vpop.permute.xlu0 %31
    %vm33 = vcmask 786112
    %34 = vst.msk [vmem:[#allocation0] sm:$0x1] %vm33, %v32
    %s35 = scalar_lea.vmem %s0, 10
    %v36 = vld [vmem:[%s35] sm:$0x1]
    %37 = vrot.lane.b32.xlu0 %v36, 80
    %v38 = vpop.permute.xlu0 %37
    %vm39 = vcmask 720512
    %40 = vst.msk [vmem:[#allocation0] sm:$0x1] %vm39, %v38
    %s41 = scalar_lea.vmem %s0, 9
    %v42 = vld [vmem:[%s41] sm:$0x1]
    %43 = vrot.lane.b32.xlu0 %v42, 72
    %v44 = vpop.permute.xlu0 %43
    %vm45 = vcmask 654912
    %46 = vst.msk [vmem:[#allocation0] sm:$0x1] %vm45, %v44
    %s47 = scalar_lea.vmem %s0, 8
    %v48 = vld [vmem:[%s47] sm:$0x1]
    %49 = vrot.lane.b32.xlu0 %v48, 64
    %v50 = vpop.permute.xlu0 %49
    %vm51 = vcmask 589312
    %52 = vst.msk [vmem:[#allocation0] sm:$0x1] %vm51, %v50
    %s53 = scalar_lea.vmem %s0, 7
    %v54 = vld [vmem:[%s53] sm:$0x1]
    %55 = vrot.lane.b32.xlu0 %v54, 56
    %v56 = vpop.permute.xlu0 %55
    %vm57 = vcmask 523712
    %58 = vst.msk [vmem:[#allocation0] sm:$0x1] %vm57, %v56
    %s59 = scalar_lea.vmem %s0, 6
    %v60 = vld [vmem:[%s59] sm:$0x1]
    %61 = vrot.lane.b32.xlu0 %v60, 48
    %v62 = vpop.permute.xlu0 %61
    %vm63 = vcmask 458112
    %64 = vst.msk [vmem:[#allocation0] sm:$0x1] %vm63, %v62
    %s65 = scalar_lea.vmem %s0, 5
    %v66 = vld [vmem:[%s65] sm:$0x1]
    %67 = vrot.lane.b32.xlu0 %v66, 40
    %v68 = vpop.permute.xlu0 %67
    %vm69 = vcmask 392512
    %70 = vst.msk [vmem:[#allocation0] sm:$0x1] %vm69, %v68
    %s71 = scalar_lea.vmem %s0, 4
    %v72 = vld [vmem:[%s71] sm:$0x1]
    %73 = vrot.lane.b32.xlu0 %v72, 32
    %v74 = vpop.permute.xlu0 %73
    %vm75 = vcmask 326912
    %76 = vst.msk [vmem:[#allocation0] sm:$0x1] %vm75, %v74
    %s77 = scalar_lea.vmem %s0, 3
    %v78 = vld [vmem:[%s77] sm:$0x1]
    %79 = vrot.lane.b32.xlu0 %v78, 24
    %v80 = vpop.permute.xlu0 %79
    %vm81 = vcmask 261312
    %82 = vst.msk [vmem:[#allocation0] sm:$0x1] %vm81, %v80
    %s83 = scalar_lea.vmem %s0, 2
    %v84 = vld [vmem:[%s83] sm:$0x1]
    %85 = vrot.lane.b32.xlu0 %v84, 16
    %v86 = vpop.permute.xlu0 %85
    %vm87 = vcmask 195712
    %88 = vst.msk [vmem:[#allocation0] sm:$0x1] %vm87, %v86
    %s89 = scalar_lea.vmem %s0, 1
    %v90 = vld [vmem:[%s89] sm:$0x1]
    %91 = vrot.lane.b32.xlu0 %v90, 8
    %v92 = vpop.permute.xlu0 %91
    %vm93 = vcmask 130112
    %94 = vst.msk [vmem:[#allocation0] sm:$0x1] %vm93, %v92
    %s96 = sshllo.u32 0, 1
    %v98 = vld [vmem:[#allocation0] sm:%s96]
    %s99 = sshllo.u32 0, 1
    %100 = vst [vmem:[%s1] sm:%s99] %v98

// kernel: downscaling_block.1
$region0: #{downscaling_block.1}
  #allocation0 [shape = 'u32[]', space=smem, size = 0x4, offset = 0x4, fixed_abs, tag = 'smem constant byte address 0x4 - core index']
  #allocation1 [shape = 'u32[144,128]{1,0:T(1,128)}', space=vmem, size = 0x12000, scoped, tag = 'internal scratch']
  #allocation2 [shape = 'bf16[1,18,64]{2,1,0:T(8,128)(2,1)}', space=vmem, size = 0x1800, scoped, tag = 'scratch operand']
  #allocation3 [shape = 'bf16[1,18,128]{2,1,0:T(8,128)(2,1)}', space=vmem, size = 0x1800, scoped, tag = 'scratch operand']
  %s0 = inlined_call_operand.vmem [shape: bf16[2,16,64], index: 0, kind: input, shape index: {}]
  %s1 = inlined_call_operand.vmem [shape: bf16[3,64,128], index: 1, kind: input, shape index: {}]
  %s2 = inlined_call_operand.vmem [shape: f32[1,128], index: 2, kind: input, shape index: {}]
  %s3 = inlined_call_operand.vmem [shape: bf16[3,128,128], index: 3, kind: input, shape index: {}]
  %s4 = inlined_call_operand.vmem [shape: f32[1,128], index: 4, kind: input, shape index: {}]
  %s5 = inlined_call_operand.vmem [shape: f32[2,8,64], index: 5, kind: output, shape index: {}]
  %s6 = sld [smem:[#allocation0]]
  $region53: #{downscaling_block.1} parent=0
    _
  %s8 = ssub.s32 1, %s6
  %s9 = scalar_select 0, %s8, %s6
  loop: start=0, step=1, limit=4
  $region2: #{downscaling_block.1} parent=0 // loop_pre_header
    _
  $region3: #{downscaling_block.1} parent=0 // loop_header
    %s11 = sphi 0, %s15
    %p12 = scmp.ge.s32.totalorder %s11, 4
    %s21 = sphi 0, %s23
    %s24 = sphi 0, %s21
    %s25 = sphi 0, %s24
    %s41 = sphi 0, %s25
    %s45 = sphi 0, %s45
    %s47 = sphi 0, %s45
    %s48 = sphi 0, %s47
    %s62 = sphi 0, %s48
    %s66 = sphi 0, %s66
    %s68 = sphi 0, %s66
    %s69 = sphi 0, %s68
    %s83 = sphi 0, %s69
    %s87 = sphi 0, %s87
    %s89 = sphi 0, %s87
    %s90 = sphi 0, %s89
    %s104 = sphi 0, %s90
    %s108 = sphi 0, %s108
    %s110 = sphi 0, %s108
    %s111 = sphi 0, %s110
    %s125 = sphi 0, %s111
    %s131 = sphi 0, %s133
    %s134 = sphi 0, %s131
    %s135 = sphi 0, %s134
    %s151 = sphi 0, %s135
  $region4: #{downscaling_block.1} parent=0 // loop_header_branch
    %14 = sbr.rel (%p12) target = $region8
  $region5: #{downscaling_block.1} parent=0 // loop_body
    %s16 = ssub.s32 %s11, 1
    %s17 = ssub.s32 %s11, 2
    %s18 = sadd.s32 %s11, 1
    %s19 = ssub.s32 %s11, %s18
    %p20 = scmp.eq.s32.totalorder %s19, 0
    %s22 = sadd.s32 %s21, 1
    %s23 = scalar_select %p20, %s21, %s22
    %p26 = pneg %p20
    %p27 = scmp.eq.s32.totalorder %s11, 1
    %p28 = por %p26, %p27
    %p29 = scmp.ne.s32.totalorder %s21, %s24
    %p30 = scmp.eq.s32.totalorder %s11, 0
    %p31 = por %p29, %p30
    %p32 = scmp.ne.s32.totalorder %s21, %s24
    %p33 = scmp.eq.s32.totalorder %s16, 1
    %p34 = por %p32, %p33
    %p35 = scmp.ne.s32.totalorder %s24, %s25
    %p36 = scmp.eq.s32.totalorder %s16, 0
    %p37 = por %p35, %p36
    %p38 = scmp.ne.s32.totalorder %s24, %s25
    %p39 = scmp.eq.s32.totalorder %s17, 1
    %p40 = por %p38, %p39
    %p42 = scmp.ne.s32.totalorder %s25, %s41
    %p43 = scmp.eq.s32.totalorder %s17, 0
    %p44 = por %p42, %p43
    %s46 = sadd.s32 %s45, 1
    %p49 = scmp.eq.s32.totalorder %s11, 1
    %p50 = scmp.ne.s32.totalorder %s45, %s47
    %p51 = scmp.eq.s32.totalorder %s11, 0
    %p52 = por %p50, %p51
    %p53 = scmp.ne.s32.totalorder %s45, %s47
    %p54 = scmp.eq.s32.totalorder %s16, 1
    %p55 = por %p53, %p54
    %p56 = scmp.ne.s32.totalorder %s47, %s48
    %p57 = scmp.eq.s32.totalorder %s16, 0
    %p58 = por %p56, %p57
    %p59 = scmp.ne.s32.totalorder %s47, %s48
    %p60 = scmp.eq.s32.totalorder %s17, 1
    %p61 = por %p59, %p60
    %p63 = scmp.ne.s32.totalorder %s48, %s62
    %p64 = scmp.eq.s32.totalorder %s17, 0
    %p65 = por %p63, %p64
    %s67 = sadd.s32 %s66, 1
    %p70 = scmp.eq.s32.totalorder %s11, 1
    %p71 = scmp.ne.s32.totalorder %s66, %s68
    %p72 = scmp.eq.s32.totalorder %s11, 0
    %p73 = por %p71, %p72
    %p74 = scmp.ne.s32.totalorder %s66, %s68
    %p75 = scmp.eq.s32.totalorder %s16, 1
    %p76 = por %p74, %p75
    %p77 = scmp.ne.s32.totalorder %s68, %s69
    %p78 = scmp.eq.s32.totalorder %s16, 0
    %p79 = por %p77, %p78
    %p80 = scmp.ne.s32.totalorder %s68, %s69
    %p81 = scmp.eq.s32.totalorder %s17, 1
    %p82 = por %p80, %p81
    %p84 = scmp.ne.s32.totalorder %s69, %s83
    %p85 = scmp.eq.s32.totalorder %s17, 0
    %p86 = por %p84, %p85
    %s88 = sadd.s32 %s87, 1
    %p91 = scmp.eq.s32.totalorder %s11, 1
    %p92 = scmp.ne.s32.totalorder %s87, %s89
    %p93 = scmp.eq.s32.totalorder %s11, 0
    %p94 = por %p92, %p93
    %p95 = scmp.ne.s32.totalorder %s87, %s89
    %p96 = scmp.eq.s32.totalorder %s16, 1
    %p97 = por %p95, %p96
    %p98 = scmp.ne.s32.totalorder %s89, %s90
    %p99 = scmp.eq.s32.totalorder %s16, 0
    %p100 = por %p98, %p99
    %p101 = scmp.ne.s32.totalorder %s89, %s90
    %p102 = scmp.eq.s32.totalorder %s17, 1
    %p103 = por %p101, %p102
    %p105 = scmp.ne.s32.totalorder %s90, %s104
    %p106 = scmp.eq.s32.totalorder %s17, 0
    %p107 = por %p105, %p106
    %s109 = sadd.s32 %s108, 1
    %p112 = scmp.eq.s32.totalorder %s11, 1
    %p113 = scmp.ne.s32.totalorder %s108, %s110
    %p114 = scmp.eq.s32.totalorder %s11, 0
    %p115 = por %p113, %p114
    %p116 = scmp.ne.s32.totalorder %s108, %s110
    %p117 = scmp.eq.s32.totalorder %s16, 1
    %p118 = por %p116, %p117
    %p119 = scmp.ne.s32.totalorder %s110, %s111
    %p120 = scmp.eq.s32.totalorder %s16, 0
    %p121 = por %p119, %p120
    %p122 = scmp.ne.s32.totalorder %s110, %s111
    %p123 = scmp.eq.s32.totalorder %s17, 1
    %p124 = por %p122, %p123
    %p126 = scmp.ne.s32.totalorder %s111, %s125
    %p127 = scmp.eq.s32.totalorder %s17, 0
    %p128 = por %p126, %p127
    %s129 = ssub.s32 %s11, %s18
    %p130 = scmp.eq.s32.totalorder %s129, 0
    %s132 = sadd.s32 %s131, 1
    %s133 = scalar_select %p130, %s131, %s132
    %p136 = pneg %p130
    %p137 = scmp.eq.s32.totalorder %s11, 1
    %p138 = por %p136, %p137
    %p139 = scmp.ne.s32.totalorder %s131, %s134
    %p140 = scmp.eq.s32.totalorder %s11, 0
    %p141 = por %p139, %p140
    %p142 = scmp.ne.s32.totalorder %s131, %s134
    %p143 = scmp.eq.s32.totalorder %s16, 1
    %p144 = por %p142, %p143
    %p145 = scmp.ne.s32.totalorder %s134, %s135
    %p146 = scmp.eq.s32.totalorder %s16, 0
    %p147 = por %p145, %p146
    %p148 = scmp.ne.s32.totalorder %s134, %s135
    %p149 = scmp.eq.s32.totalorder %s17, 1
    %p150 = por %p148, %p149
    %p152 = scmp.ne.s32.totalorder %s135, %s151
    %p153 = scmp.eq.s32.totalorder %s17, 0
    %p154 = por %p152, %p153
    %p155 = scmp.le.s32.totalorder 1, %s11
    %p156 = scmp.lt.s32.totalorder %s11, 3
    %p157 = pnand %p155, %p156
    %p158 = pneg %p157
    // Predicated region
    $region9: #{downscaling_block.1} parent=5 // pred_check
      _
    $region10: #{downscaling_block.1} parent=5 // pred_check_branch
      %160 = sbr.rel (%p157) target = $region12
    $region11: #{downscaling_block.1} parent=5 // pred_region
      %s161 = ssub.s32 %s11, 1
      // Predicated region
      $region13: #{downscaling_block.1} parent=11 // pred_check
        %p162 = pneg %p58
      $region14: #{downscaling_block.1} parent=11 // pred_check_branch
        %164 = sbr.rel (%p162) target = $region16
      $region15: #{downscaling_block.1} parent=11 // pred_region
        _
      $region16: #{downscaling_block.1} parent=11 // pred_fallthru
        _
      // Predicated region
      $region17: #{downscaling_block.1} parent=11 // pred_check
        %p165 = pneg %p79
      $region18: #{downscaling_block.1} parent=11 // pred_check_branch
        %167 = sbr.rel (%p165) target = $region20
      $region19: #{downscaling_block.1} parent=11 // pred_region
        _
      $region20: #{downscaling_block.1} parent=11 // pred_fallthru
        _
      // Predicated region
      $region21: #{downscaling_block.1} parent=11 // pred_check
        %p168 = pneg %p100
      $region22: #{downscaling_block.1} parent=11 // pred_check_branch
        %170 = sbr.rel (%p168) target = $region24
      $region23: #{downscaling_block.1} parent=11 // pred_region
        _
      $region24: #{downscaling_block.1} parent=11 // pred_fallthru
        _
      // Predicated region
      $region25: #{downscaling_block.1} parent=11 // pred_check
        %p171 = pneg %p121
      $region26: #{downscaling_block.1} parent=11 // pred_check_branch
        %173 = sbr.rel (%p171) target = $region28
      $region27: #{downscaling_block.1} parent=11 // pred_region
        _
      $region28: #{downscaling_block.1} parent=11 // pred_fallthru
        _
    $region12: #{downscaling_block.1} parent=5 // pred_fallthru
      _
    %p174 = scmp.lt.s32.totalorder %s11, 2
    // Predicated region
    $region29: #{downscaling_block.1} parent=5 // pred_check
      %p175 = pneg %p174
    $region30: #{downscaling_block.1} parent=5 // pred_check_branch
      %177 = sbr.rel (%p175) target = $region32
    $region31: #{downscaling_block.1} parent=5 // pred_region
      // Predicated region
      $region33: #{downscaling_block.1} parent=31 // pred_check
        %p178 = pneg %p31
      $region34: #{downscaling_block.1} parent=31 // pred_check_branch
        %180 = sbr.rel (%p178) target = $region36
      $region35: #{downscaling_block.1} parent=31 // pred_region
        %p181 = scmp.lt.s32.totalorder %s11, 1
        %s182 = scalar_select %p181, %s11, 1
        %s183 = smul.addr %s182, 2
        %s184 = smul.addr %s183, 4
        %s185 = scalar_lea.vmem %s0, %s184
      $region36: #{downscaling_block.1} parent=31 // pred_fallthru
        _
    $region32: #{downscaling_block.1} parent=5 // pred_fallthru
      _
    %p186 = scmp.le.s32.totalorder 1, %s11
    %p187 = scmp.lt.s32.totalorder %s11, 3
    %p188 = pnand %p186, %p187
    %p189 = pneg %p188
    // Predicated region
    $region37: #{downscaling_block.1} parent=5 // pred_check
      _
    $region38: #{downscaling_block.1} parent=5 // pred_check_branch
      %191 = sbr.rel (%p188) target = $region40
    $region39: #{downscaling_block.1} parent=5 // pred_region
      %s192 = ssub.s32 %s11, 1
      %p193 = scmp.lt.s32.totalorder %s16, 1
      %s194 = scalar_select %p193, %s16, 1
      %s195 = smul.addr %s194, 2
      %s196 = smul.addr %s195, 4
      %s197 = scalar_lea.vmem %s0, %s196
      %p198 = pneg %p37
      %p199 = pneg %p34
      %p200 = pneg %p58
      %p201 = pneg %p55
      %p202 = pneg %p79
      %p203 = pneg %p76
      %p204 = pneg %p100
      %p205 = pneg %p97
      %p206 = pneg %p121
      %p207 = pneg %p118
      %p208 = pneg %p147
      %p209 = pneg %p144
      %p210 = scmp.lt.s32.totalorder %s16, 1
      %s211 = scalar_select %p210, %s16, 1
      %s212 = smul.addr %s211, 8
      %s213 = scalar_lea.vmem %s5, %s212
      %p214 = scmp.lt.s32.totalorder %s16, 1
      %s215 = scalar_select %p214, %s16, 1
      %s216 = smul.addr %s215, 2
      %s217 = smul.addr %s216, 4
      %s218 = scalar_lea.vmem %s0, %s217
      %p219 = scmp.lt.s32.totalorder %s16, 1
      %s220 = scalar_select %p219, %s16, 1
      %s221 = smul.addr %s220, 8
      %s222 = scalar_lea.vmem %s5, %s221
      %vm224 = vcmask 516096
      %vm225 = vsmask.f32 256
      %vm226 = vmand %vm224, %vm225
      %v227 = vld [vmem:[#allocation2] sm:$0x1]
      %v228 = vsel %vm226, 0, %v227
      %229 = vst [vmem:[#allocation2] sm:$0x1] %v228
      %vm230 = vsmask.f32 7938
      %vm231 = vmand %vm224, %vm230
      %v232 = vld [vmem:[#allocation2 + $0x8] sm:$0x1]
      %v233 = vsel %vm231, 0, %v232
      %234 = vst [vmem:[#allocation2 + $0x8] sm:$0x1] %v233
      %v235 = vld [vmem:[%s218] sm:$0xf]
      %v236 = vld [vmem:[%s218 + $0x4] sm:$0xf]
      %vm237 = vsmask.f32 4368
      %vm238 = vmor %vm225, %vm237
      %v240 = vshrl.u32 %v235, 16
      %v242 = vrot.slane %v240, 7
      %v243 = vshll.u32 %v235, 16
      %v245 = vor.u32 %v242, %v243
      %v246 = vrot.slane %v242, 4
      %v248 = vshrl.u32 %v236, 16
      %v250 = vrot.slane %v248, 7
      %v251 = vshll.u32 %v236, 16
      %v253 = vor.u32 %v250, %v251
      %v254 = vsel %vm238, %v246, %v253
      %v255 = vrot.slane %v250, 4
      %vm259 = vcmask 519168
      %vm260 = vmand %vm259, %vm230
      %v261 = vld [vmem:[#allocation2] sm:$0xf]
      %v262 = vsel %vm260, %v245, %v261
      %263 = vst [vmem:[#allocation2] sm:$0xf] %v262
      %vm264 = vcmask 519168
      %265 = vst.msk [vmem:[#allocation2 + $0x4] sm:$0xf] %vm264, %v254
      %v266 = vld [vmem:[#allocation2 + $0x8] sm:$0x1]
      %v267 = vsel %vm226, %v255, %v266
      %268 = vst [vmem:[#allocation2 + $0x8] sm:$0x1] %v267
      %v269 = vld [vmem:[#allocation2] sm:$0xf]
      %v270 = vld [vmem:[#allocation2 + $0x4] sm:$0xf]
      %v271 = vld [vmem:[%s1] sm:$0xf]
      %v272 = vld [vmem:[%s1 + $0x4] sm:$0xf]
      %v273 = vld [vmem:[%s1 + $0x8] sm:$0xf]
      %v274 = vld [vmem:[%s1 + $0xc] sm:$0xf]
      %v275 = vld [vmem:[%s1 + $0x10] sm:$0xf]
      %v276 = vld [vmem:[%s1 + $0x14] sm:$0xf]
      %v277 = vld [vmem:[%s1 + $0x18] sm:$0xf]
      %v278 = vld [vmem:[%s1 + $0x1c] sm:$0xf]
      %v279 = vld [vmem:[#allocation2 + $0x8] sm:$0x1]
      %s280 = scalar_lea.vmem %s1, 32
      %v281 = vld [vmem:[%s280] sm:$0xf]
      %v282 = vld [vmem:[%s280 + $0x4] sm:$0xf]
      %v283 = vld [vmem:[%s280 + $0x8] sm:$0xf]
      %v284 = vld [vmem:[%s280 + $0xc] sm:$0xf]
      %v285 = vld [vmem:[%s280 + $0x10] sm:$0xf]
      %v286 = vld [vmem:[%s280 + $0x14] sm:$0xf]
      %v287 = vld [vmem:[%s280 + $0x18] sm:$0xf]
      %v288 = vld [vmem:[%s280 + $0x1c] sm:$0xf]
      %v292 = vunpack.c.l.b16 %v269
      %v293 = vunpack.c.l.b16 %v270
      %v294 = vunpack.c.l.b16 %v279
      %v295 = vpack.c.b16 %v293, %v292
      %v296 = vpack.c.b16 %v294, %v294
      %vm297 = vsmask.f32 7424
      %v299 = vshrl.u32 %v295, 16
      %v301 = vshll.u32 %v295, 16
      %v303 = vrot.slane %v301, 1
      %v304 = vor.u32 %v299, %v303
      %v306 = vshll.u32 %v296, 16
      %v308 = vrot.slane %v306, 1
      %v309 = vsel %vm297, %v304, %v308
      %v318 = vunpack.c.l.b16 %v281
      %v319 = vunpack.c.l.b16 %v282
      %v320 = vunpack.c.l.b16 %v283
      %v321 = vunpack.c.l.b16 %v284
      %v322 = vunpack.c.l.b16 %v285
      %v323 = vunpack.c.l.b16 %v286
      %v324 = vunpack.c.l.b16 %v287
      %v325 = vunpack.c.l.b16 %v288
      %v326 = vpack.c.b16 %v319, %v318
      %v327 = vpack.c.b16 %v321, %v320
      %v328 = vpack.c.b16 %v323, %v322
      %v329 = vpack.c.b16 %v325, %v324
      %vm334 = vcmask 523264
      %v336 = vsel %vm334, %v309, 0
      %338 = vmatprep.subr.bf16.mxu0 0
      %339 = vmatpush1.bf16.msra.mxu0 %v326
      %340 = vmatprep.subr.bf16.mxu0 0
      %341 = vmatpush1.bf16.msra.mxu0 %v327
      %342 = vmatprep.subr.bf16.mxu0 0
      %343 = vmatpush1.bf16.msra.mxu0 %v328
      %344 = vmatprep.subr.bf16.mxu0 0
      %345 = vmatpush1.bf16.msra.mxu0 %v329
      %346 = vmatprep.subr.bf16.mxu0 0
      %347 = vmatpush1.bf16.msra.mxu0 0
      %348 = vmatprep.subr.bf16.mxu0 0
      %349 = vmatpush1.bf16.msra.mxu0 0
      %350 = vmatprep.subr.bf16.mxu0 0
      %351 = vmatpush1.bf16.msra.mxu0 0
      %352 = vmatprep.subr.bf16.mxu0 0
      %353 = vmatpush1.bf16.msra.mxu0 0
      %354 = vmatprep.subr.bf16.mxu0 0
      %355 = vmatpush1.bf16.msra.mxu0 0
      %356 = vmatprep.subr.bf16.mxu0 0
      %357 = vmatpush1.bf16.msra.mxu0 0
      %358 = vmatprep.subr.bf16.mxu0 0
      %359 = vmatpush1.bf16.msra.mxu0 0
      %360 = vmatprep.subr.bf16.mxu0 0
      %361 = vmatpush1.bf16.msra.mxu0 0
      %362 = vmatprep.subr.bf16.mxu0 0
      %363 = vmatpush1.bf16.msra.mxu0 0
      %364 = vmatprep.subr.bf16.mxu0 0
      %365 = vmatpush1.bf16.msra.mxu0 0
      %366 = vmatprep.subr.bf16.mxu0 0
      %367 = vmatpush1.bf16.msra.mxu0 0
      %368 = vmatprep.subr.bf16.mxu0 0
      %369 = vmatpush1.bf16.msra.mxu0 0
      %370 = vmatprep.mubr.bf16.mxu0 0
      %371 = vmatmul.mubr.bf16.gmra.mrb[0].mxu0 %v336
      %v372 = vpop.f32.mrb[0].mxu0
      %v373 = vadd.f32 0.0, %v372
      %v374 = vpop.f32.mrb[0].mxu0
      %v375 = vpop.f32.mrb[0].mxu0
      %v376 = vadd.f32 0.0, %v375
      %v377 = vpop.f32.mrb[0].mxu0
      %378 = vdwg.mxu0
      %v387 = vunpack.c.l.b16 %v271
      %v388 = vunpack.c.l.b16 %v272
      %v389 = vunpack.c.l.b16 %v273
      %v390 = vunpack.c.l.b16 %v274
      %v391 = vunpack.c.l.b16 %v275
      %v392 = vunpack.c.l.b16 %v276
      %v393 = vunpack.c.l.b16 %v277
      %v394 = vunpack.c.l.b16 %v278
      %v395 = vpack.c.b16 %v388, %v387
      %v396 = vpack.c.b16 %v390, %v389
      %v397 = vpack.c.b16 %v392, %v391
      %v398 = vpack.c.b16 %v394, %v393
      %v403 = vsel %vm334, %v295, 0
      %405 = vmatprep.subr.bf16.mxu0 0
      %406 = vmatpush1.bf16.msra.mxu0 %v395
      %407 = vmatprep.subr.bf16.mxu0 0
      %408 = vmatpush1.bf16.msra.mxu0 %v396
      %409 = vmatprep.subr.bf16.mxu0 0
      %410 = vmatpush1.bf16.msra.mxu0 %v397
      %411 = vmatprep.subr.bf16.mxu0 0
      %412 = vmatpush1.bf16.msra.mxu0 %v398
      %413 = vmatprep.subr.bf16.mxu0 0
      %414 = vmatpush1.bf16.msra.mxu0 0
      %415 = vmatprep.subr.bf16.mxu0 0
      %416 = vmatpush1.bf16.msra.mxu0 0
      %417 = vmatprep.subr.bf16.mxu0 0
      %418 = vmatpush1.bf16.msra.mxu0 0
      %419 = vmatprep.subr.bf16.mxu0 0
      %420 = vmatpush1.bf16.msra.mxu0 0
      %421 = vmatprep.subr.bf16.mxu0 0
      %422 = vmatpush1.bf16.msra.mxu0 0
      %423 = vmatprep.subr.bf16.mxu0 0
      %424 = vmatpush1.bf16.msra.mxu0 0
      %425 = vmatprep.subr.bf16.mxu0 0
      %426 = vmatpush1.bf16.msra.mxu0 0
      %427 = vmatprep.subr.bf16.mxu0 0
      %428 = vmatpush1.bf16.msra.mxu0 0
      %429 = vmatprep.subr.bf16.mxu0 0
      %430 = vmatpush1.bf16.msra.mxu0 0
      %431 = vmatprep.subr.bf16.mxu0 0
      %432 = vmatpush1.bf16.msra.mxu0 0
      %433 = vmatprep.subr.bf16.mxu0 0
      %434 = vmatpush1.bf16.msra.mxu0 0
      %435 = vmatprep.subr.bf16.mxu0 0
      %436 = vmatpush1.bf16.msra.mxu0 0
      %437 = vmatprep.mubr.bf16.mxu0 0
      %438 = vmatmul.mubr.bf16.gmra.mrb[0].mxu0 %v403
      %v439 = vpop.f32.mrb[0].mxu0
      %v440 = vadd.f32 %v373, %v439
      %v441 = vpop.f32.mrb[0].mxu0
      %v442 = vpop.f32.mrb[0].mxu0
      %v443 = vadd.f32 %v376, %v442
      %v444 = vpop.f32.mrb[0].mxu0
      %445 = vdwg.mxu0
      %v446 = vld [vmem:[#allocation2] sm:$0xe]
      %s447 = scalar_lea.vmem %s1, 64
      %v448 = vld [vmem:[%s447] sm:$0xf]
      %v449 = vld [vmem:[%s447 + $0x4] sm:$0xf]
      %v450 = vld [vmem:[%s447 + $0x8] sm:$0xf]
      %v451 = vld [vmem:[%s447 + $0xc] sm:$0xf]
      %v452 = vld [vmem:[%s447 + $0x10] sm:$0xf]
      %v453 = vld [vmem:[%s447 + $0x14] sm:$0xf]
      %v454 = vld [vmem:[%s447 + $0x18] sm:$0xf]
      %v455 = vld [vmem:[%s447 + $0x1c] sm:$0xf]
      %v457 = vunpack.c.l.b16 %v446
      %v458 = vpack.c.b16 %v293, %v457
      %vm459 = vcmask 1046528
      %v460 = vrot.slane %v458, 1
      %v461 = vrot.slane %v296, 1
      %v462 = vsel %vm459, %v460, %v461
      %v471 = vunpack.c.l.b16 %v448
      %v472 = vunpack.c.l.b16 %v449
      %v473 = vunpack.c.l.b16 %v450
      %v474 = vunpack.c.l.b16 %v451
      %v475 = vunpack.c.l.b16 %v452
      %v476 = vunpack.c.l.b16 %v453
      %v477 = vunpack.c.l.b16 %v454
      %v478 = vunpack.c.l.b16 %v455
      %v479 = vpack.c.b16 %v472, %v471
      %v480 = vpack.c.b16 %v474, %v473
      %v481 = vpack.c.b16 %v476, %v475
      %v482 = vpack.c.b16 %v478, %v477
      %v488 = vsel %vm334, %v462, 0
      %490 = vmatprep.subr.bf16.mxu0 0
      %491 = vmatpush1.bf16.msra.mxu0 %v479
      %492 = vmatprep.subr.bf16.mxu0 0
      %493 = vmatpush1.bf16.msra.mxu0 %v480
      %494 = vmatprep.subr.bf16.mxu0 0
      %495 = vmatpush1.bf16.msra.mxu0 %v481
      %496 = vmatprep.subr.bf16.mxu0 0
      %497 = vmatpush1.bf16.msra.mxu0 %v482
      %498 = vmatprep.subr.bf16.mxu0 0
      %499 = vmatpush1.bf16.msra.mxu0 0
      %500 = vmatprep.subr.bf16.mxu0 0
      %501 = vmatpush1.bf16.msra.mxu0 0
      %502 = vmatprep.subr.bf16.mxu0 0
      %503 = vmatpush1.bf16.msra.mxu0 0
      %504 = vmatprep.subr.bf16.mxu0 0
      %505 = vmatpush1.bf16.msra.mxu0 0
      %506 = vmatprep.subr.bf16.mxu0 0
      %507 = vmatpush1.bf16.msra.mxu0 0
      %508 = vmatprep.subr.bf16.mxu0 0
      %509 = vmatpush1.bf16.msra.mxu0 0
      %510 = vmatprep.subr.bf16.mxu0 0
      %511 = vmatpush1.bf16.msra.mxu0 0
      %512 = vmatprep.subr.bf16.mxu0 0
      %513 = vmatpush1.bf16.msra.mxu0 0
      %514 = vmatprep.subr.bf16.mxu0 0
      %515 = vmatpush1.bf16.msra.mxu0 0
      %516 = vmatprep.subr.bf16.mxu0 0
      %517 = vmatpush1.bf16.msra.mxu0 0
      %518 = vmatprep.subr.bf16.mxu0 0
      %519 = vmatpush1.bf16.msra.mxu0 0
      %520 = vmatprep.subr.bf16.mxu0 0
      %521 = vmatpush1.bf16.msra.mxu0 0
      %522 = vmatprep.mubr.bf16.mxu0 0
      %523 = vmatmul.mubr.bf16.gmra.mrb[0].mxu0 %v488
      %v524 = vpop.f32.mrb[0].mxu0
      %v525 = vadd.f32 0.0, %v524
      %v526 = vpop.f32.mrb[0].mxu0
      %v527 = vpop.f32.mrb[0].mxu0
      %v528 = vadd.f32 0.0, %v527
      %v529 = vpop.f32.mrb[0].mxu0
      %530 = vdwg.mxu0
      %v531 = vadd.f32 %v440, %v525
      %v532 = vadd.f32 %v443, %v528
      %v533 = vld [vmem:[%s2] sm:$0x1]
      %v535 = vlaneseq
      %v536 = vshrl.u32 %v535, 7
      %v537 = vsub.s32 0, %v536
      %v538 = vrot.slane %v533, %v537
      %v540 = vadd.f32 %v531, %v538
      %v541 = vadd.f32 %v532, %v538
      %v542 = vmax.f32 %v540, 0.0
      %v543 = vmax.f32 %v541, 0.0
      %vm544 = vcmask 1040384
      %vm545 = vmand %vm544, %vm225
      %v546 = vld [vmem:[#allocation3] sm:$0x1]
      %v547 = vsel %vm545, 0, %v546
      %548 = vst [vmem:[#allocation3] sm:$0x1] %v547
      %vm549 = vmand %vm544, %vm230
      %v550 = vld [vmem:[#allocation3 + $0x8] sm:$0x1]
      %v551 = vsel %vm549, 0, %v550
      %552 = vst [vmem:[#allocation3 + $0x8] sm:$0x1] %v551
      %v553 = vpack.c.bf16 %v543, %v542
      %v555 = vunpack.c.l.b16 %v553
      %v556 = vunpack.c.h.b16 %v553
      %v557 = vpack.c.b16 %v555, %v555
      %v558 = vpack.c.b16 %v556, %v556
      %v560 = vshrl.u32 %v557, 16
      %v562 = vrot.slane %v560, 7
      %v563 = vshll.u32 %v557, 16
      %v565 = vor.u32 %v562, %v563
      %v566 = vrot.slane %v562, 4
      %v568 = vshrl.u32 %v558, 16
      %v570 = vrot.slane %v568, 7
      %v571 = vshll.u32 %v558, 16
      %v573 = vor.u32 %v570, %v571
      %v574 = vsel %vm238, %v566, %v573
      %v575 = vrot.slane %v570, 4
      %vm579 = vcmask 1043456
      %vm580 = vmand %vm579, %vm230
      %v581 = vld [vmem:[#allocation3] sm:$0xf]
      %v582 = vsel %vm580, %v565, %v581
      %583 = vst [vmem:[#allocation3] sm:$0xf] %v582
      %584 = vst [vmem:[#allocation3 + $0x4] sm:$0xf] %v574
      %v585 = vld [vmem:[#allocation3 + $0x8] sm:$0x1]
      %v586 = vsel %vm545, %v575, %v585
      %587 = vst [vmem:[#allocation3 + $0x8] sm:$0x1] %v586
      %v588 = vld [vmem:[#allocation3] sm:$0xf]
      %v589 = vld [vmem:[#allocation3 + $0x4] sm:$0xf]
      %v590 = vld [vmem:[%s3] sm:$0xf]
      %v591 = vld [vmem:[%s3 + $0x4] sm:$0xf]
      %v592 = vld [vmem:[%s3 + $0x8] sm:$0xf]
      %v593 = vld [vmem:[%s3 + $0xc] sm:$0xf]
      %v594 = vld [vmem:[%s3 + $0x10] sm:$0xf]
      %v595 = vld [vmem:[%s3 + $0x14] sm:$0xf]
      %v596 = vld [vmem:[%s3 + $0x18] sm:$0xf]
      %v597 = vld [vmem:[%s3 + $0x1c] sm:$0xf]
      %v598 = vld [vmem:[%s3 + $0x20] sm:$0xf]
      %v599 = vld [vmem:[%s3 + $0x24] sm:$0xf]
      %v600 = vld [vmem:[%s3 + $0x28] sm:$0xf]
      %v601 = vld [vmem:[%s3 + $0x2c] sm:$0xf]
      %v602 = vld [vmem:[%s3 + $0x30] sm:$0xf]
      %v603 = vld [vmem:[%s3 + $0x34] sm:$0xf]
      %v604 = vld [vmem:[%s3 + $0x38] sm:$0xf]
      %v605 = vld [vmem:[%s3 + $0x3c] sm:$0xf]
      %v606 = vld [vmem:[#allocation3 + $0x8] sm:$0x1]
      %s607 = scalar_lea.vmem %s3, 64
      %v608 = vld [vmem:[%s607] sm:$0xf]
      %v609 = vld [vmem:[%s607 + $0x4] sm:$0xf]
      %v610 = vld [vmem:[%s607 + $0x8] sm:$0xf]
      %v611 = vld [vmem:[%s607 + $0xc] sm:$0xf]
      %v612 = vld [vmem:[%s607 + $0x10] sm:$0xf]
      %v613 = vld [vmem:[%s607 + $0x14] sm:$0xf]
      %v614 = vld [vmem:[%s607 + $0x18] sm:$0xf]
      %v615 = vld [vmem:[%s607 + $0x1c] sm:$0xf]
      %v616 = vld [vmem:[%s607 + $0x20] sm:$0xf]
      %v617 = vld [vmem:[%s607 + $0x24] sm:$0xf]
      %v618 = vld [vmem:[%s607 + $0x28] sm:$0xf]
      %v619 = vld [vmem:[%s607 + $0x2c] sm:$0xf]
      %v620 = vld [vmem:[%s607 + $0x30] sm:$0xf]
      %v621 = vld [vmem:[%s607 + $0x34] sm:$0xf]
      %v622 = vld [vmem:[%s607 + $0x38] sm:$0xf]
      %v623 = vld [vmem:[%s607 + $0x3c] sm:$0xf]
      %v627 = vunpack.c.l.b16 %v588
      %v628 = vunpack.c.l.b16 %v589
      %v629 = vunpack.c.l.b16 %v606
      %v630 = vpack.c.b16 %v628, %v627
      %v631 = vpack.c.b16 %v629, %v629
      %v633 = vshrl.u32 %v630, 16
      %v635 = vshll.u32 %v630, 16
      %v637 = vrot.slane %v635, 1
      %v638 = vor.u32 %v633, %v637
      %v640 = vshll.u32 %v631, 16
      %v642 = vrot.slane %v640, 1
      %v643 = vsel %vm297, %v638, %v642
      %v661 = vunpack.c.l.b16 %v608
      %v662 = vunpack.c.l.b16 %v609
      %v663 = vunpack.c.l.b16 %v610
      %v664 = vunpack.c.l.b16 %v611
      %v665 = vunpack.c.l.b16 %v612
      %v666 = vunpack.c.l.b16 %v613
      %v667 = vunpack.c.l.b16 %v614
      %v668 = vunpack.c.l.b16 %v615
      %v669 = vunpack.c.l.b16 %v616
      %v670 = vunpack.c.l.b16 %v617
      %v671 = vunpack.c.l.b16 %v618
      %v672 = vunpack.c.l.b16 %v619
      %v673 = vunpack.c.l.b16 %v620
      %v674 = vunpack.c.l.b16 %v621
      %v675 = vunpack.c.l.b16 %v622
      %v676 = vunpack.c.l.b16 %v623
      %v677 = vpack.c.b16 %v662, %v661
      %v678 = vpack.c.b16 %v664, %v663
      %v679 = vpack.c.b16 %v666, %v665
      %v680 = vpack.c.b16 %v668, %v667
      %v681 = vpack.c.b16 %v670, %v669
      %v682 = vpack.c.b16 %v672, %v671
      %v683 = vpack.c.b16 %v674, %v673
      %v684 = vpack.c.b16 %v676, %v675
      %693 = vmatprep.subr.bf16.mxu0 0
      %694 = vmatpush1.bf16.msra.mxu0 %v677
      %695 = vmatprep.subr.bf16.mxu0 0
      %696 = vmatpush1.bf16.msra.mxu0 %v678
      %697 = vmatprep.subr.bf16.mxu0 0
      %698 = vmatpush1.bf16.msra.mxu0 %v679
      %699 = vmatprep.subr.bf16.mxu0 0
      %700 = vmatpush1.bf16.msra.mxu0 %v680
      %701 = vmatprep.subr.bf16.mxu0 0
      %702 = vmatpush1.bf16.msra.mxu0 %v681
      %703 = vmatprep.subr.bf16.mxu0 0
      %704 = vmatpush1.bf16.msra.mxu0 %v682
      %705 = vmatprep.subr.bf16.mxu0 0
      %706 = vmatpush1.bf16.msra.mxu0 %v683
      %707 = vmatprep.subr.bf16.mxu0 0
      %708 = vmatpush1.bf16.msra.mxu0 %v684
      %709 = vmatprep.subr.bf16.mxu0 0
      %710 = vmatpush1.bf16.msra.mxu0 0
      %711 = vmatprep.subr.bf16.mxu0 0
      %712 = vmatpush1.bf16.msra.mxu0 0
      %713 = vmatprep.subr.bf16.mxu0 0
      %714 = vmatpush1.bf16.msra.mxu0 0
      %715 = vmatprep.subr.bf16.mxu0 0
      %716 = vmatpush1.bf16.msra.mxu0 0
      %717 = vmatprep.subr.bf16.mxu0 0
      %718 = vmatpush1.bf16.msra.mxu0 0
      %719 = vmatprep.subr.bf16.mxu0 0
      %720 = vmatpush1.bf16.msra.mxu0 0
      %721 = vmatprep.subr.bf16.mxu0 0
      %722 = vmatpush1.bf16.msra.mxu0 0
      %723 = vmatprep.subr.bf16.mxu0 0
      %724 = vmatpush1.bf16.msra.mxu0 0
      %725 = vmatprep.mubr.bf16.mxu0 0
      %726 = vmatmul.mubr.bf16.gmra.mrb[0].mxu0 %v643
      %v727 = vpop.f32.mrb[0].mxu0
      %v728 = vadd.f32 0.0, %v727
      %v729 = vpop.f32.mrb[0].mxu0
      %v730 = vpop.f32.mrb[0].mxu0
      %v731 = vadd.f32 0.0, %v730
      %v732 = vpop.f32.mrb[0].mxu0
      %733 = vdwg.mxu0
      %v751 = vunpack.c.l.b16 %v590
      %v752 = vunpack.c.l.b16 %v591
      %v753 = vunpack.c.l.b16 %v592
      %v754 = vunpack.c.l.b16 %v593
      %v755 = vunpack.c.l.b16 %v594
      %v756 = vunpack.c.l.b16 %v595
      %v757 = vunpack.c.l.b16 %v596
      %v758 = vunpack.c.l.b16 %v597
      %v759 = vunpack.c.l.b16 %v598
      %v760 = vunpack.c.l.b16 %v599
      %v761 = vunpack.c.l.b16 %v600
      %v762 = vunpack.c.l.b16 %v601
      %v763 = vunpack.c.l.b16 %v602
      %v764 = vunpack.c.l.b16 %v603
      %v765 = vunpack.c.l.b16 %v604
      %v766 = vunpack.c.l.b16 %v605
      %v767 = vpack.c.b16 %v752, %v751
      %v768 = vpack.c.b16 %v754, %v753
      %v769 = vpack.c.b16 %v756, %v755
      %v770 = vpack.c.b16 %v758, %v757
      %v771 = vpack.c.b16 %v760, %v759
      %v772 = vpack.c.b16 %v762, %v761
      %v773 = vpack.c.b16 %v764, %v763
      %v774 = vpack.c.b16 %v766, %v765
      %783 = vmatprep.subr.bf16.mxu0 0
      %784 = vmatpush1.bf16.msra.mxu0 %v767
      %785 = vmatprep.subr.bf16.mxu0 0
      %786 = vmatpush1.bf16.msra.mxu0 %v768
      %787 = vmatprep.subr.bf16.mxu0 0
      %788 = vmatpush1.bf16.msra.mxu0 %v769
      %789 = vmatprep.subr.bf16.mxu0 0
      %790 = vmatpush1.bf16.msra.mxu0 %v770
      %791 = vmatprep.subr.bf16.mxu0 0
      %792 = vmatpush1.bf16.msra.mxu0 %v771
      %793 = vmatprep.subr.bf16.mxu0 0
      %794 = vmatpush1.bf16.msra.mxu0 %v772
      %795 = vmatprep.subr.bf16.mxu0 0
      %796 = vmatpush1.bf16.msra.mxu0 %v773
      %797 = vmatprep.subr.bf16.mxu0 0
      %798 = vmatpush1.bf16.msra.mxu0 %v774
      %799 = vmatprep.subr.bf16.mxu0 0
      %800 = vmatpush1.bf16.msra.mxu0 0
      %801 = vmatprep.subr.bf16.mxu0 0
      %802 = vmatpush1.bf16.msra.mxu0 0
      %803 = vmatprep.subr.bf16.mxu0 0
      %804 = vmatpush1.bf16.msra.mxu0 0
      %805 = vmatprep.subr.bf16.mxu0 0
      %806 = vmatpush1.bf16.msra.mxu0 0
      %807 = vmatprep.subr.bf16.mxu0 0
      %808 = vmatpush1.bf16.msra.mxu0 0
      %809 = vmatprep.subr.bf16.mxu0 0
      %810 = vmatpush1.bf16.msra.mxu0 0
      %811 = vmatprep.subr.bf16.mxu0 0
      %812 = vmatpush1.bf16.msra.mxu0 0
      %813 = vmatprep.subr.bf16.mxu0 0
      %814 = vmatpush1.bf16.msra.mxu0 0
      %815 = vmatprep.mubr.bf16.mxu0 0
      %816 = vmatmul.mubr.bf16.gmra.mrb[0].mxu0 %v630
      %v817 = vpop.f32.mrb[0].mxu0
      %v818 = vadd.f32 %v728, %v817
      %v819 = vpop.f32.mrb[0].mxu0
      %v820 = vpop.f32.mrb[0].mxu0
      %v821 = vadd.f32 %v731, %v820
      %v822 = vpop.f32.mrb[0].mxu0
      %823 = vdwg.mxu0
      %v824 = vld [vmem:[#allocation3] sm:$0xe]
      %s825 = scalar_lea.vmem %s3, 128
      %v826 = vld [vmem:[%s825] sm:$0xf]
      %v827 = vld [vmem:[%s825 + $0x4] sm:$0xf]
      %v828 = vld [vmem:[%s825 + $0x8] sm:$0xf]
      %v829 = vld [vmem:[%s825 + $0xc] sm:$0xf]
      %v830 = vld [vmem:[%s825 + $0x10] sm:$0xf]
      %v831 = vld [vmem:[%s825 + $0x14] sm:$0xf]
      %v832 = vld [vmem:[%s825 + $0x18] sm:$0xf]
      %v833 = vld [vmem:[%s825 + $0x1c] sm:$0xf]
      %v834 = vld [vmem:[%s825 + $0x20] sm:$0xf]
      %v835 = vld [vmem:[%s825 + $0x24] sm:$0xf]
      %v836 = vld [vmem:[%s825 + $0x28] sm:$0xf]
      %v837 = vld [vmem:[%s825 + $0x2c] sm:$0xf]
      %v838 = vld [vmem:[%s825 + $0x30] sm:$0xf]
      %v839 = vld [vmem:[%s825 + $0x34] sm:$0xf]
      %v840 = vld [vmem:[%s825 + $0x38] sm:$0xf]
      %v841 = vld [vmem:[%s825 + $0x3c] sm:$0xf]
      %v843 = vunpack.c.l.b16 %v824
      %v844 = vpack.c.b16 %v628, %v843
      %v845 = vrot.slane %v844, 1
      %v846 = vrot.slane %v631, 1
      %v847 = vsel %vm459, %v845, %v846
      %v865 = vunpack.c.l.b16 %v826
      %v866 = vunpack.c.l.b16 %v827
      %v867 = vunpack.c.l.b16 %v828
      %v868 = vunpack.c.l.b16 %v829
      %v869 = vunpack.c.l.b16 %v830
      %v870 = vunpack.c.l.b16 %v831
      %v871 = vunpack.c.l.b16 %v832
      %v872 = vunpack.c.l.b16 %v833
      %v873 = vunpack.c.l.b16 %v834
      %v874 = vunpack.c.l.b16 %v835
      %v875 = vunpack.c.l.b16 %v836
      %v876 = vunpack.c.l.b16 %v837
      %v877 = vunpack.c.l.b16 %v838
      %v878 = vunpack.c.l.b16 %v839
      %v879 = vunpack.c.l.b16 %v840
      %v880 = vunpack.c.l.b16 %v841
      %v881 = vpack.c.b16 %v866, %v865
      %v882 = vpack.c.b16 %v868, %v867
      %v883 = vpack.c.b16 %v870, %v869
      %v884 = vpack.c.b16 %v872, %v871
      %v885 = vpack.c.b16 %v874, %v873
      %v886 = vpack.c.b16 %v876, %v875
      %v887 = vpack.c.b16 %v878, %v877
      %v888 = vpack.c.b16 %v880, %v879
      %897 = vmatprep.subr.bf16.mxu0 0
      %898 = vmatpush1.bf16.msra.mxu0 %v881
      %899 = vmatprep.subr.bf16.mxu0 0
      %900 = vmatpush1.bf16.msra.mxu0 %v882
      %901 = vmatprep.subr.bf16.mxu0 0
      %902 = vmatpush1.bf16.msra.mxu0 %v883
      %903 = vmatprep.subr.bf16.mxu0 0
      %904 = vmatpush1.bf16.msra.mxu0 %v884
      %905 = vmatprep.subr.bf16.mxu0 0
      %906 = vmatpush1.bf16.msra.mxu0 %v885
      %907 = vmatprep.subr.bf16.mxu0 0
      %908 = vmatpush1.bf16.msra.mxu0 %v886
      %909 = vmatprep.subr.bf16.mxu0 0
      %910 = vmatpush1.bf16.msra.mxu0 %v887
      %911 = vmatprep.subr.bf16.mxu0 0
      %912 = vmatpush1.bf16.msra.mxu0 %v888
      %913 = vmatprep.subr.bf16.mxu0 0
      %914 = vmatpush1.bf16.msra.mxu0 0
      %915 = vmatprep.subr.bf16.mxu0 0
      %916 = vmatpush1.bf16.msra.mxu0 0
      %917 = vmatprep.subr.bf16.mxu0 0
      %918 = vmatpush1.bf16.msra.mxu0 0
      %919 = vmatprep.subr.bf16.mxu0 0
      %920 = vmatpush1.bf16.msra.mxu0 0
      %921 = vmatprep.subr.bf16.mxu0 0
      %922 = vmatpush1.bf16.msra.mxu0 0
      %923 = vmatprep.subr.bf16.mxu0 0
      %924 = vmatpush1.bf16.msra.mxu0 0
      %925 = vmatprep.subr.bf16.mxu0 0
      %926 = vmatpush1.bf16.msra.mxu0 0
      %927 = vmatprep.subr.bf16.mxu0 0
      %928 = vmatpush1.bf16.msra.mxu0 0
      %929 = vmatprep.mubr.bf16.mxu0 0
      %930 = vmatmul.mubr.bf16.gmra.mrb[0].mxu0 %v847
      %v931 = vpop.f32.mrb[0].mxu0
      %v932 = vadd.f32 0.0, %v931
      %v933 = vpop.f32.mrb[0].mxu0
      %v934 = vpop.f32.mrb[0].mxu0
      %v935 = vadd.f32 0.0, %v934
      %v936 = vpop.f32.mrb[0].mxu0
      %937 = vdwg.mxu0
      %v938 = vadd.f32 %v818, %v932
      %v939 = vadd.f32 %v821, %v935
      %v940 = vld [vmem:[%s4] sm:$0x1]
      %v942 = vlaneseq
      %v943 = vshrl.u32 %v942, 7
      %v944 = vsub.s32 0, %v943
      %v945 = vrot.slane %v940, %v944
      %v947 = vadd.f32 %v938, %v945
      %v948 = vadd.f32 %v939, %v945
      %v949 = vmax.f32 %v947, 0.0
      %v950 = vmax.f32 %v948, 0.0
      %953 = vrot.lane.b32.xlu0 %v949, 64
      %v954 = vpop.permute.xlu0 %953
      %955 = vrot.lane.b32.xlu0 %v950, 64
      %v956 = vpop.permute.xlu0 %955
      %v959 = vmax.f32 %v949, %v954
      %v960 = vmax.f32 %v950, %v956
      %v963 = vcombine.high %v959, %v959
      %v965 = vunpack.c.l.s4 1983009808
      %v966 = vunpack.c.0.s8 %v965
      %v967 = vlaneseq
      %v968 = vshrl.u32 %v967, 7
      %v969 = vsub.s32 %v966, %v968
      %v970 = vrot.slane %v959, %v969
      %v972 = vunpack.c.l.s4 1983009808
      %v973 = vunpack.c.0.s8 %v972
      %v974 = vlaneseq
      %v975 = vshrl.u32 %v974, 7
      %v976 = vsub.s32 %v973, %v975
      %v977 = vrot.slane %v963, %v976
      %v978 = vcombine.high %v970, %v970
      %v979 = vcombine.high %v977, %v977
      %v980 = vcombine.high %v960, %v960
      %v982 = vunpack.c.l.s4 1983009808
      %v983 = vunpack.c.0.s8 %v982
      %v984 = vlaneseq
      %v985 = vshrl.u32 %v984, 7
      %v986 = vsub.s32 %v983, %v985
      %v987 = vrot.slane %v960, %v986
      %v989 = vunpack.c.l.s4 1983009808
      %v990 = vunpack.c.0.s8 %v989
      %v991 = vlaneseq
      %v992 = vshrl.u32 %v991, 7
      %v993 = vsub.s32 %v990, %v992
      %v994 = vrot.slane %v980, %v993
      %v995 = vcombine.high %v987, %v987
      %v996 = vcombine.high %v994, %v994
      %vm1005 = vcmask 517120
      %v1006 = vsel %vm1005, %v970, -inf
      %v1007 = vrot.slane %v1006, 4
      %v1008 = vmax.f32 %v1006, %v1007
      %v1009 = vrot.slane %v1008, 2
      %v1010 = vmax.f32 %v1008, %v1009
      %v1011 = vrot.slane %v1010, 1
      %v1012 = vmax.f32 %v1010, %v1011
      %v1013 = vsel %vm1005, %v978, -inf
      %v1014 = vrot.slane %v1013, 4
      %v1015 = vmax.f32 %v1013, %v1014
      %v1016 = vrot.slane %v1015, 2
      %v1017 = vmax.f32 %v1015, %v1016
      %v1018 = vrot.slane %v1017, 1
      %v1019 = vmax.f32 %v1017, %v1018
      %v1020 = vsel %vm1005, %v977, -inf
      %v1021 = vrot.slane %v1020, 4
      %v1022 = vmax.f32 %v1020, %v1021
      %v1023 = vrot.slane %v1022, 2
      %v1024 = vmax.f32 %v1022, %v1023
      %v1025 = vrot.slane %v1024, 1
      %v1026 = vmax.f32 %v1024, %v1025
      %v1027 = vsel %vm1005, %v979, -inf
      %v1028 = vrot.slane %v1027, 4
      %v1029 = vmax.f32 %v1027, %v1028
      %v1030 = vrot.slane %v1029, 2
      %v1031 = vmax.f32 %v1029, %v1030
      %v1032 = vrot.slane %v1031, 1
      %v1033 = vmax.f32 %v1031, %v1032
      %v1034 = vsel %vm1005, %v987, -inf
      %v1035 = vrot.slane %v1034, 4
      %v1036 = vmax.f32 %v1034, %v1035
      %v1037 = vrot.slane %v1036, 2
      %v1038 = vmax.f32 %v1036, %v1037
      %v1039 = vrot.slane %v1038, 1
      %v1040 = vmax.f32 %v1038, %v1039
      %v1041 = vsel %vm1005, %v995, -inf
      %v1042 = vrot.slane %v1041, 4
      %v1043 = vmax.f32 %v1041, %v1042
      %v1044 = vrot.slane %v1043, 2
      %v1045 = vmax.f32 %v1043, %v1044
      %v1046 = vrot.slane %v1045, 1
      %v1047 = vmax.f32 %v1045, %v1046
      %v1048 = vsel %vm1005, %v994, -inf
      %v1049 = vrot.slane %v1048, 4
      %v1050 = vmax.f32 %v1048, %v1049
      %v1051 = vrot.slane %v1050, 2
      %v1052 = vmax.f32 %v1050, %v1051
      %v1053 = vrot.slane %v1052, 1
      %v1054 = vmax.f32 %v1052, %v1053
      %v1055 = vsel %vm1005, %v996, -inf
      %v1056 = vrot.slane %v1055, 4
      %v1057 = vmax.f32 %v1055, %v1056
      %v1058 = vrot.slane %v1057, 2
      %v1059 = vmax.f32 %v1057, %v1058
      %v1060 = vrot.slane %v1059, 1
      %v1061 = vmax.f32 %v1059, %v1060
      %vm1070 = vcmask 1041409
      %v1071 = vsel %vm1070, %v1019, %v1012
      %vm1072 = vcmask 1042434
      %v1073 = vsel %vm1072, %v1026, %v1071
      %vm1074 = vcmask 1043459
      %v1075 = vsel %vm1074, %v1033, %v1073
      %vm1076 = vcmask 1044484
      %v1077 = vsel %vm1076, %v1040, %v1075
      %vm1078 = vcmask 1045509
      %v1079 = vsel %vm1078, %v1047, %v1077
      %vm1080 = vcmask 1046534
      %v1081 = vsel %vm1080, %v1054, %v1079
      %vm1082 = vcmask 1047559
      %v1083 = vsel %vm1082, %v1061, %v1081
      %1085 = vst.msk [vmem:[%s222] sm:$0xff] %vm334, %v1083
      %p1086 = scmp.lt.s32.totalorder %s16, 1
      %s1087 = scalar_select %p1086, %s16, 1
      %s1088 = smul.addr %s1087, 8
      %s1089 = scalar_lea.vmem %s5, %s1088
      // Predicated region
      $region41: #{downscaling_block.1} parent=39 // pred_check
        %p1090 = pneg %p144
      $region42: #{downscaling_block.1} parent=39 // pred_check_branch
        %1092 = sbr.rel (%p1090) target = $region44
      $region43: #{downscaling_block.1} parent=39 // pred_region
        _
      $region44: #{downscaling_block.1} parent=39 // pred_fallthru
        _
    $region40: #{downscaling_block.1} parent=5 // pred_fallthru
      _
    %p1093 = scmp.le.s32.totalorder 2, %s11
    // Predicated region
    $region45: #{downscaling_block.1} parent=5 // pred_check
      %p1094 = pneg %p1093
    $region46: #{downscaling_block.1} parent=5 // pred_check_branch
      %1096 = sbr.rel (%p1094) target = $region48
    $region47: #{downscaling_block.1} parent=5 // pred_region
      %s1097 = ssub.s32 %s11, 2
      // Predicated region
      $region49: #{downscaling_block.1} parent=47 // pred_check
        %p1098 = pneg %p150
      $region50: #{downscaling_block.1} parent=47 // pred_check_branch
        %1100 = sbr.rel (%p1098) target = $region52
      $region51: #{downscaling_block.1} parent=47 // pred_region
        %p1101 = scmp.lt.s32.totalorder %s17, 1
        %s1102 = scalar_select %p1101, %s17, 1
        %s1103 = smul.addr %s1102, 8
        %s1104 = scalar_lea.vmem %s5, %s1103
      $region52: #{downscaling_block.1} parent=47 // pred_fallthru
        _
    $region48: #{downscaling_block.1} parent=5 // pred_fallthru
      _
  $region6: #{downscaling_block.1} parent=0 // loop_footer
    %s15 = sadd.s32 1, %s11
  $region7: #{downscaling_block.1} parent=0 // loop_footer_branch
    %10 = sbr.rel target = $region3
  $region8: #{downscaling_block.1} parent=0 // loop_exit
    _

</llo_original>
